<compile_context>
chip_gen: v7x
topology: tpu7x:2x2x1
jax: 0.10.0
libtpu: 0.0.40
codegen_flags: <defaults>
</compile_context>

<pallas_src>
import math
import functools

import jax
import jax.numpy as jnp
from jax.experimental import pallas as pl
from jax.experimental.pallas import tpu as pltpu


COMPUTE_DTYPE = jnp.bfloat16          # MXU-native on v5e/v6e/v7x
VMEM_LIMIT_BYTES = 32 * 1024 * 1024   # leaves headroom inside v7x's 64 MiB VMEM


# ---------------------------------------------------------------------------
# Kernel 1: fused Q/K/V projection, tiled over rows, packed [H, 3H] weight.
#   x_ref: [TM, H] (f32, cast to bf16 in-kernel), w_ref: [H, 3H] (bf16, resident)
#   b_ref: [1, 3H] (f32, resident), q/k/v_ref: [TM, H] (bf16)
# ---------------------------------------------------------------------------
def qkv_proj_kernel(x_ref, w_ref, b_ref, q_ref, k_ref, v_ref):
    x = x_ref[...].astype(COMPUTE_DTYPE)          # cast the tile in-kernel
    acc = jnp.dot(x, w_ref[...], preferred_element_type=jnp.float32)
    acc = acc + b_ref[...]
    h = q_ref.shape[-1]
    q_ref[...] = acc[:, 0 * h:1 * h].astype(q_ref.dtype)
    k_ref[...] = acc[:, 1 * h:2 * h].astype(k_ref.dtype)
    v_ref[...] = acc[:, 2 * h:3 * h].astype(v_ref.dtype)


# ---------------------------------------------------------------------------
# Kernel 2: scaled dot-product attention for one (batch, head-group, q-tile).
#   q_ref: [TQ, HG*D], k_ref/v_ref: [S, HG*D]  (bf16, heads sliced from hidden)
#   mask_ref: [1, S] additive mask (f32)
#   out_refs: ctx_ref [TQ, HG*D] (+ optional probs_ref [HG, TQ, S])
# ---------------------------------------------------------------------------
def attention_kernel(q_ref, k_ref, v_ref, mask_ref, *out_refs,
                     heads, head_dim):
    ctx_ref = out_refs[0]
    probs_ref = out_refs[1] if len(out_refs) > 1 else None

    scale = 1.0 / math.sqrt(head_dim)
    q = q_ref[...] * scale          # python-float scale keeps bf16 (weak type)
    k = k_ref[...]
    v = v_ref[...]
    # Hoist the [1,S]->[TQ,S] mask broadcast out of the unrolled head loop
    # (JAX does not CSE broadcast_in_dim).
    mask_b = jnp.broadcast_to(mask_ref[...], (q.shape[0], mask_ref.shape[-1]))

    # TODO(synk): on v5e the D-wide per-head slices leave half the 128-deep MXU
    # idle; if MXU-bound there, restructure to a batched dot_general / padded D.
    for h in range(heads):          # static unrolled loop over heads in group
        sl = slice(h * head_dim, (h + 1) * head_dim)
        # contract on the last axis of both operands (no explicit k.T)
        scores = jax.lax.dot_general(
            q[:, sl], k[:, sl],
            dimension_numbers=(((1,), (1,)), ((), ())),
            preferred_element_type=jnp.float32)
        scores = scores + mask_b
        m = jnp.max(scores, axis=-1, keepdims=True)              # f32 reduce
        e = jnp.exp((scores - m).astype(jnp.bfloat16))           # bf16 EUP exp
        denom = jnp.sum(e.astype(jnp.float32), axis=-1, keepdims=True)  # f32
        if probs_ref is not None:
            inv = pl.reciprocal(denom, approx=False)   # exact: rows sum to ~1
        else:
            inv = pl.reciprocal(denom, approx=True)    # EUP vrcp, ~free
        p = e * inv.astype(jnp.bfloat16)               # stays bf16 for the MXU
        if probs_ref is not None:
            probs_ref[h] = p.astype(jnp.float32)
        # dropout(attention_probs) is identity in eval mode; head_mask is None.
        part = jnp.dot(p, v[:, sl], preferred_element_type=jnp.float32)
        ctx_ref[:, sl] = part.astype(ctx_ref.dtype)    # direct slice store


# ---------------------------------------------------------------------------
# Python wrappers
# ---------------------------------------------------------------------------
def _heads_per_group(num_heads, head_dim, hidden):
    """Smallest head group whose lane width is 128-aligned (or the full H)."""
    for hg in range(1, num_heads + 1):
        if num_heads % hg:
            continue
        width = hg * head_dim
        if width % 128 == 0 or width == hidden:
            return hg
    return num_heads


def prepare_qkv_params(params):
    """One-time packing of the q/k/v Linear params (do this at setup time).

    Weights are expected in [in, out] layout (PyTorch weight.T).  Returns a
    single [H, 3H] bf16 weight and a [1, 3H] f32 bias so the per-call path
    launches no convert/concat XLA ops.
    """
    wq, bq, wk, bk, wv, bv = params
    w_packed = jnp.concatenate([wq, wk, wv], axis=1).astype(COMPUTE_DTYPE)
    b_packed = jnp.concatenate(
        [jnp.reshape(bq, (1, -1)), jnp.reshape(bk, (1, -1)),
         jnp.reshape(bv, (1, -1))], axis=1).astype(jnp.float32)
    return w_packed, b_packed


def bert_self_attention(hidden_states, attention_mask, packed_params,
                        num_heads, output_attentions=False):
    B, S, H = hidden_states.shape
    D = H // num_heads
    w_packed, b_packed = packed_params

    # ---------------- Kernel 1: QKV projection (tiled over M = B*S) --------
    M = B * S
    TM = min(M, 512)
    x2d = hidden_states.reshape(M, H)        # f32; tile is cast in-kernel

    row_in_spec = pl.BlockSpec((TM, H), lambda i: (i, 0))
    # Constant index maps keep the packed weight/bias VMEM-resident: Pallas
    # only re-issues a DMA when the block index changes across grid steps.
    w_spec = pl.BlockSpec((H, 3 * H), lambda i: (0, 0))
    b_spec = pl.BlockSpec((1, 3 * H), lambda i: (0, 0))
    row_out_spec = pl.BlockSpec((TM, H), lambda i: (i, 0))

    qkv_cost = pl.CostEstimate(
        flops=int(2 * M * H * 3 * H),
        transcendentals=0,
        bytes_accessed=int(M * H * 4 + 3 * H * H * 2 + 3 * H * 4
                           + 3 * M * H * 2))

    q2d, k2d, v2d = pl.pallas_call(
        qkv_proj_kernel,
        grid=(pl.cdiv(M, TM),),
        out_shape=tuple(jax.ShapeDtypeStruct((M, H), COMPUTE_DTYPE)
                        for _ in range(3)),
        in_specs=[row_in_spec, w_spec, b_spec],
        out_specs=(row_out_spec, row_out_spec, row_out_spec),
        compiler_params=pltpu.CompilerParams(
            dimension_semantics=("parallel",),
            vmem_limit_bytes=VMEM_LIMIT_BYTES),
        cost_estimate=qkv_cost,
    )(x2d, w_packed, b_packed)

    # Reshapes only (no transposes): heads are sliced from H by the BlockSpecs.
    q = q2d.reshape(B, S, H)
    k = k2d.reshape(B, S, H)
    v = v2d.reshape(B, S, H)

    # ---------------- Kernel 2: attention (batch, head-group, q-tile) ------
    HG = _heads_per_group(num_heads, D, H)   # heads per grid cell (lane-dense)
    GW = HG * D                              # lane width of one head group
    TQ = min(S, 512)                         # larger query tile (fewer steps)

    if attention_mask is None:
        mask3 = jnp.zeros((B, 1, S), dtype=jnp.float32)
    else:
        # TODO(synk): assumes a key-only [B,1,1,S] additive mask; per-query
        # [B,1,S,S] extended masks are not supported by this reshape.
        mask3 = attention_mask.reshape(B, 1, S).astype(jnp.float32)

    qg_spec = pl.BlockSpec((None, TQ, GW), lambda b, g, qi: (b, qi, g))
    kv_spec = pl.BlockSpec((None, S, GW), lambda b, g, qi: (b, 0, g))
    mask_spec = pl.BlockSpec((None, 1, S), lambda b, g, qi: (b, 0, 0))
    ctx_spec = pl.BlockSpec((None, TQ, GW), lambda b, g, qi: (b, qi, g))

    out_shapes = [jax.ShapeDtypeStruct((B, S, H), hidden_states.dtype)]
    out_specs = [ctx_spec]
    if output_attentions:
        out_shapes.append(jax.ShapeDtypeStruct((B, num_heads, S, S),
                                               jnp.float32))
        out_specs.append(
            pl.BlockSpec((None, HG, TQ, S), lambda b, g, qi: (b, g, qi, 0)))

    out_itemsize = jnp.dtype(hidden_states.dtype).itemsize
    attn_bytes = 3 * B * S * H * 2 + B * S * 4 + B * S * H * out_itemsize
    if output_attentions:
        attn_bytes += B * num_heads * S * S * 4
    attn_cost = pl.CostEstimate(
        flops=int(4 * B * num_heads * S * S * D),
        transcendentals=int(B * num_heads * S * S),
        bytes_accessed=int(attn_bytes))

    results = pl.pallas_call(
        functools.partial(attention_kernel, heads=HG, head_dim=D),
        grid=(B, num_heads // HG, pl.cdiv(S, TQ)),
        out_shape=tuple(out_shapes),
        in_specs=[qg_spec, kv_spec, kv_spec, mask_spec],
        out_specs=tuple(out_specs),
        compiler_params=pltpu.CompilerParams(
            dimension_semantics=("parallel", "parallel", "parallel"),
            vmem_limit_bytes=VMEM_LIMIT_BYTES),
        cost_estimate=attn_cost,
    )(q, k, v, mask3)

    # TODO(synk): head_mask multiplication and train-mode dropout on
    # attention_probs are not implemented (module defaults: None / eval).
    if output_attentions:
        context_layer, probs = results
        return context_layer, probs
    context_layer = results[0] if isinstance(results, (tuple, list)) else results
    return (context_layer,)


# ---------------------------------------------------------------------------
# Pure-JAX reference for validation
# ---------------------------------------------------------------------------
def ref_bert_self_attention(x, mask, params, num_heads):
    B, S, H = x.shape
    D = H // num_heads
    wq, bq, wk, bk, wv, bv = params
    q = x.reshape(B * S, H) @ wq + bq
    k = x.reshape(B * S, H) @ wk + bk
    v = x.reshape(B * S, H) @ wv + bv
    qh = q.reshape(B, S, num_heads, D).transpose(0, 2, 1, 3)
    kh = k.reshape(B, S, num_heads, D).transpose(0, 2, 1, 3)
    vh = v.reshape(B, S, num_heads, D).transpose(0, 2, 1, 3)
    scores = jnp.einsum("bhqd,bhkd->bhqk", qh, kh) / math.sqrt(D) + mask
    probs = jax.nn.softmax(scores, axis=-1)
    ctx = jnp.einsum("bhqk,bhkd->bhqd", probs, vh)
    return ctx.transpose(0, 2, 1, 3).reshape(B, S, H), probs


if __name__ == "__main__":
    # Small config: batch=2, seq=8, hidden=32, heads=4 (head_dim=8)
    B, S, H, NH = 2, 8, 32, 4

    key = jax.random.PRNGKey(0)
    keys = jax.random.split(key, 8)

    hidden_states = jax.random.normal(keys[0], (B, S, H), dtype=jnp.float32)

    # Deterministic parameter init (weights stored [in, out], i.e. PyTorch W.T)
    wq = 0.02 * jax.random.normal(keys[1], (H, H), dtype=jnp.float32)
    wk = 0.02 * jax.random.normal(keys[2], (H, H), dtype=jnp.float32)
    wv = 0.02 * jax.random.normal(keys[3], (H, H), dtype=jnp.float32)
    bq = 0.01 * jax.random.normal(keys[4], (1, H), dtype=jnp.float32)
    bk = 0.01 * jax.random.normal(keys[5], (1, H), dtype=jnp.float32)
    bv = 0.01 * jax.random.normal(keys[6], (1, H), dtype=jnp.float32)
    params = (wq, bq, wk, bk, wv, bv)

    # Pack / cast q,k,v weights ONCE (setup-time), not per forward call.
    packed_params = prepare_qkv_params(params)
    packed_params = jax.block_until_ready(packed_params)

    # Additive attention mask [B, 1, 1, S]: mask out the last 2 keys of batch 1.
    pad = jnp.ones((B, S), dtype=jnp.float32).at[1, -2:].set(0.0)
    attention_mask = ((1.0 - pad) * -10000.0)[:, None, None, :]

    ctx, probs = bert_self_attention(hidden_states, attention_mask,
                                     packed_params, NH, output_attentions=True)
    (ctx_only,) = bert_self_attention(hidden_states, attention_mask,
                                      packed_params, NH,
                                      output_attentions=False)
    jax.block_until_ready((ctx, probs, ctx_only))

    ref_ctx, ref_probs = ref_bert_self_attention(hidden_states, attention_mask,
                                                 params, NH)
    assert ctx.shape == (B, S, H)
    assert probs.shape == (B, NH, S, S)
    assert ctx_only.shape == (B, S, H)
    # bf16 MXU compute + bf16 exp + approx reciprocal -> modest tolerances
    assert jnp.allclose(ctx, ref_ctx, atol=2e-2, rtol=2e-2)
    assert jnp.allclose(probs, ref_probs, atol=2e-2, rtol=2e-2)
    assert jnp.allclose(ctx_only, ref_ctx, atol=2e-2, rtol=2e-2)

    print("KERNEL_OK")
</pallas_src>

<mosaic_0001>
module attributes {stable_mosaic.version = 11 : i64} {
  func.func @qkv_proj_kernel(%arg0: i32, %arg1: memref<16x32xf32, #tpu.memory_space<vmem>>, %arg2: memref<32x96xbf16, #tpu.memory_space<vmem>>, %arg3: memref<1x96xf32, #tpu.memory_space<vmem>>, %arg4: memref<16x32xbf16, #tpu.memory_space<vmem>>, %arg5: memref<16x32xbf16, #tpu.memory_space<vmem>>, %arg6: memref<16x32xbf16, #tpu.memory_space<vmem>>) attributes {dimension_semantics = [#tpu.dimension_semantics<parallel>], iteration_bounds = array<i64: 1>, scalar_prefetch = 0 : i64, scratch_operands = 0 : i64, tpu.core_type = #tpu.core_type<tc>, window_params = [{transform_indices = @transform_0, window_bounds = array<i64: 16, 32>}, {pipeline_mode = #tpu.pipeline_mode<synchronous>, transform_indices = @transform_1, window_bounds = array<i64: 32, 96>}, {pipeline_mode = #tpu.pipeline_mode<synchronous>, transform_indices = @transform_2, window_bounds = array<i64: 1, 96>}, {transform_indices = @transform_3, window_bounds = array<i64: 16, 32>}, {transform_indices = @transform_4, window_bounds = array<i64: 16, 32>}, {transform_indices = @transform_5, window_bounds = array<i64: 16, 32>}]} {
    %c0 = arith.constant 0 : index
    %c0_0 = arith.constant 0 : index
    %0 = vector.load %arg1[%c0, %c0_0] : memref<16x32xf32, #tpu.memory_space<vmem>>, vector<16x32xf32>
    %1 = arith.truncf %0 : vector<16x32xf32> to vector<16x32xbf16>
    %c0_1 = arith.constant 0 : index
    %c0_2 = arith.constant 0 : index
    %2 = vector.load %arg2[%c0_1, %c0_2] : memref<32x96xbf16, #tpu.memory_space<vmem>>, vector<32x96xbf16>
    %cst = arith.constant dense<0.000000e+00> : vector<16x96xf32>
    %3 = tpu.matmul %1, %2, %cst {dimension_numbers = #tpu.dot_dimension_numbers<[1], [0], [0], [1], [0, 0, 1, 1], [], []>} : vector<16x32xbf16>, vector<32x96xbf16>, vector<16x96xf32> -> vector<16x96xf32>
    %c0_3 = arith.constant 0 : index
    %c0_4 = arith.constant 0 : index
    %4 = vector.load %arg3[%c0_3, %c0_4] : memref<1x96xf32, #tpu.memory_space<vmem>>, vector<1x96xf32>
    %5 = vector.broadcast %4 : vector<1x96xf32> to vector<16x96xf32>
    %6 = arith.addf %3, %5 : vector<16x96xf32>
    %7 = vector.extract_strided_slice %6 {offsets = [0, 0], sizes = [16, 32], strides = [1, 1]} : vector<16x96xf32> to vector<16x32xf32>
    %8 = arith.truncf %7 : vector<16x32xf32> to vector<16x32xbf16>
    %c0_5 = arith.constant 0 : index
    %c0_6 = arith.constant 0 : index
    %9 = vector.load %arg4[%c0_5, %c0_6] : memref<16x32xbf16, #tpu.memory_space<vmem>>, vector<16x32xbf16>
    tpu.vector_store %arg4[%c0_5, %c0_6], %8 {strides = array<i32>} : memref<16x32xbf16, #tpu.memory_space<vmem>>, vector<16x32xbf16>,
    %10 = vector.extract_strided_slice %6 {offsets = [0, 32], sizes = [16, 32], strides = [1, 1]} : vector<16x96xf32> to vector<16x32xf32>
    %11 = arith.truncf %10 : vector<16x32xf32> to vector<16x32xbf16>
    %c0_7 = arith.constant 0 : index
    %c0_8 = arith.constant 0 : index
    %12 = vector.load %arg5[%c0_7, %c0_8] : memref<16x32xbf16, #tpu.memory_space<vmem>>, vector<16x32xbf16>
    tpu.vector_store %arg5[%c0_7, %c0_8], %11 {strides = array<i32>} : memref<16x32xbf16, #tpu.memory_space<vmem>>, vector<16x32xbf16>,
    %13 = vector.extract_strided_slice %6 {offsets = [0, 64], sizes = [16, 32], strides = [1, 1]} : vector<16x96xf32> to vector<16x32xf32>
    %14 = arith.truncf %13 : vector<16x32xf32> to vector<16x32xbf16>
    %c0_9 = arith.constant 0 : index
    %c0_10 = arith.constant 0 : index
    %15 = vector.load %arg6[%c0_9, %c0_10] : memref<16x32xbf16, #tpu.memory_space<vmem>>, vector<16x32xbf16>
    tpu.vector_store %arg6[%c0_9, %c0_10], %14 {strides = array<i32>} : memref<16x32xbf16, #tpu.memory_space<vmem>>, vector<16x32xbf16>,
    return
  }
  func.func @transform_0(%arg0: i32) -> (i32, i32) {
    %c0_i32 = arith.constant 0 : i32
    %c0_i32_0 = arith.constant 0 : i32
    return %arg0, %c0_i32 : i32, i32
  }
  func.func @transform_1(%arg0: i32) -> (i32, i32) {
    %c0_i32 = arith.constant 0 : i32
    %c0_i32_0 = arith.constant 0 : i32
    %c0_i32_1 = arith.constant 0 : i32
    return %c0_i32, %c0_i32_0 : i32, i32
  }
  func.func @transform_2(%arg0: i32) -> (i32, i32) {
    %c0_i32 = arith.constant 0 : i32
    %c0_i32_0 = arith.constant 0 : i32
    %c0_i32_1 = arith.constant 0 : i32
    return %c0_i32, %c0_i32_0 : i32, i32
  }
  func.func @transform_3(%arg0: i32) -> (i32, i32) {
    %c0_i32 = arith.constant 0 : i32
    %c0_i32_0 = arith.constant 0 : i32
    return %arg0, %c0_i32 : i32, i32
  }
  func.func @transform_4(%arg0: i32) -> (i32, i32) {
    %c0_i32 = arith.constant 0 : i32
    %c0_i32_0 = arith.constant 0 : i32
    return %arg0, %c0_i32 : i32, i32
  }
  func.func @transform_5(%arg0: i32) -> (i32, i32) {
    %c0_i32 = arith.constant 0 : i32
    %c0_i32_0 = arith.constant 0 : i32
    return %arg0, %c0_i32 : i32, i32
  }
}

</mosaic_0001>

<llo_original>
// kernel: tpu_custom_call.1
$region0: #{tpu_custom_call.1}
  #allocation0 [shape = 'u32[]', space=smem, size = 0x4, offset = 0x4, fixed_abs, tag = 'smem constant byte address 0x4 - core index']
  #allocation1 [shape = 'u32[144,128]{1,0:T(1,128)}', space=vmem, size = 0x12000, scoped, tag = 'internal scratch']
  %s0 = inlined_call_operand.hbm [shape: f32[16,32], index: 0, kind: input, shape index: {}]
  %s1 = inlined_call_operand.hbm [shape: bf16[32,96], index: 1, kind: input, shape index: {}]
  %s2 = inlined_call_operand.vmem [shape: f32[1,96], index: 2, kind: input, shape index: {}]
  %s3 = inlined_call_operand.hbm [shape: bf16[16,32], index: 3, kind: output, shape index: {0}]
  %s4 = inlined_call_operand.hbm [shape: bf16[16,32], index: 4, kind: output, shape index: {1}]
  %s5 = inlined_call_operand.hbm [shape: bf16[16,32], index: 5, kind: output, shape index: {2}]
  %6 = xla_tuple %s3, %s4, %s5
  %s7 = sld [smem:[#allocation0]]
  $region46: #{tpu_custom_call.1} parent=0
    _
  %s9 = ssub.s32 1, %s7
  %s10 = scalar_select 0, %s9, %s7
  $region1: #{tpu_custom_call.1} parent=0
    #allocation2 [shape = 'u8[8192]{0}', space=vmem, size = 0x2000, scoped, tag = 'input window, operand 0, single buffered']
    #allocation3 [shape = 's32[1]{0}', space=sflag, size = 0x4, scoped, tag = 'scoped memory for tpu_custom_call.1']
    #allocation4 [shape = 's32[1]{0}', space=sflag, size = 0x4, scoped, tag = 'scoped memory for tpu_custom_call.1']
    #allocation5 [shape = 'u8[8192]{0}', space=vmem, size = 0x2000, scoped, tag = 'input window, operand 1, single buffered']
    #allocation6 [shape = 's32[1]{0}', space=sflag, size = 0x4, scoped, tag = 'scoped memory for tpu_custom_call.1']
    #allocation7 [shape = 'u8[4096]{0}', space=vmem, size = 0x1000, scoped, tag = 'output window, operand 0, single buffered']
    #allocation8 [shape = 'u8[4096]{0}', space=vmem, size = 0x1000, scoped, tag = 'output window, operand 1, single buffered']
    #allocation9 [shape = 's32[1]{0}', space=sflag, size = 0x4, scoped, tag = 'scoped memory for tpu_custom_call.1']
    #allocation10 [shape = 'u8[4096]{0}', space=vmem, size = 0x1000, scoped, tag = 'output window, operand 2, single buffered']
    %11 = vsyncpa [#allocation3], 0
    %12 = vsyncpa [#allocation6], 0
    %13 = vsyncpa [#allocation4], 0
    %14 = vsyncpa [#allocation9], 0
    // Predicated region
    $region2: #{tpu_custom_call.1} parent=1 // pred_check
      _
    $region3: #{tpu_custom_call.1} parent=1 // pred_check_branch
      %16 = sbr.rel (0) target = $region5
    $region4: #{tpu_custom_call.1} parent=1 // pred_region
      %s18 = ssub.s32 256, 256
      %19 = vsyncadd [#allocation3], %s18
      %s20 = sshll.u32 [#allocation2], 4
      %s21 = int_to_ptr.vmem [resolvable:$true] %s20
      %26 = dma.hbm_to_vmem [thread:$0]  %s0, 256, %s21, [#allocation3], 128, 128, 8
    $region5: #{tpu_custom_call.1} parent=1 // pred_fallthru
      _
    // Predicated region
    $region6: #{tpu_custom_call.1} parent=1 // pred_check
      _
    $region7: #{tpu_custom_call.1} parent=1 // pred_check_branch
      %28 = sbr.rel (0) target = $region9
    $region8: #{tpu_custom_call.1} parent=1 // pred_region
      %s30 = ssub.s32 256, 256
      %31 = vsyncadd [#allocation6], %s30
      %s32 = sshll.u32 [#allocation5], 4
      %s33 = int_to_ptr.vmem [resolvable:$true] %s32
      %38 = dma.hbm_to_vmem [thread:$0]  %s1, 256, %s33, [#allocation6], 64, 64, 4
    $region9: #{tpu_custom_call.1} parent=1 // pred_fallthru
      _
    // Predicated region
    $region10: #{tpu_custom_call.1} parent=1 // pred_check
      _
    $region11: #{tpu_custom_call.1} parent=1 // pred_check_branch
      %40 = sbr.rel (0) target = $region13
    $region12: #{tpu_custom_call.1} parent=1 // pred_region
      _
    $region13: #{tpu_custom_call.1} parent=1 // pred_fallthru
      _
    // Predicated region
    $region14: #{tpu_custom_call.1} parent=1 // pred_check
      _
    $region15: #{tpu_custom_call.1} parent=1 // pred_check_branch
      %42 = sbr.rel (0) target = $region17
    $region16: #{tpu_custom_call.1} parent=1 // pred_region
      %43 = dma.done [#allocation3], 256
    $region17: #{tpu_custom_call.1} parent=1 // pred_fallthru
      _
    // Predicated region
    $region18: #{tpu_custom_call.1} parent=1 // pred_check
      _
    $region19: #{tpu_custom_call.1} parent=1 // pred_check_branch
      %45 = sbr.rel (0) target = $region21
    $region20: #{tpu_custom_call.1} parent=1 // pred_region
      %46 = dma.done [#allocation6], 256
    $region21: #{tpu_custom_call.1} parent=1 // pred_fallthru
      _
    %v48 = vld [vmem:[#allocation2] sm:$0xff]
    %v49 = vld [vmem:[#allocation2 + $0x8] sm:$0xff]
    %v50 = vpack.c.bf16 %v49, %v48
    %v51 = vld [vmem:[#allocation5] sm:$0xf]
    %v52 = vld [vmem:[#allocation5 + $0x4] sm:$0xf]
    %v53 = vld [vmem:[#allocation5 + $0x8] sm:$0xf]
    %v54 = vld [vmem:[#allocation5 + $0xc] sm:$0xf]
    %v55 = vld [vmem:[%s2] sm:$0x1]
    %v57 = vlaneseq
    %v58 = vshrl.u32 %v57, 7
    %v59 = vsub.s32 0, %v58
    %v60 = vrot.slane %v55, %v59
    %v66 = vunpack.c.l.b16 %v51
    %v67 = vunpack.c.l.b16 %v52
    %v68 = vunpack.c.l.b16 %v53
    %v69 = vunpack.c.l.b16 %v54
    %v70 = vpack.c.b16 %v67, %v66
    %v71 = vpack.c.b16 %v69, %v68
    %vm74 = vcmask 261120
    %v76 = vsel %vm74, %v50, 0
    %78 = vmatprep.subr.bf16.mxu0 0
    %79 = vmatpush1.bf16.msra.mxu0 %v70
    %80 = vmatprep.subr.bf16.mxu0 0
    %81 = vmatpush1.bf16.msra.mxu0 %v71
    %82 = vmatprep.subr.bf16.mxu0 0
    %83 = vmatpush1.bf16.msra.mxu0 0
    %84 = vmatprep.subr.bf16.mxu0 0
    %85 = vmatpush1.bf16.msra.mxu0 0
    %86 = vmatprep.subr.bf16.mxu0 0
    %87 = vmatpush1.bf16.msra.mxu0 0
    %88 = vmatprep.subr.bf16.mxu0 0
    %89 = vmatpush1.bf16.msra.mxu0 0
    %90 = vmatprep.subr.bf16.mxu0 0
    %91 = vmatpush1.bf16.msra.mxu0 0
    %92 = vmatprep.subr.bf16.mxu0 0
    %93 = vmatpush1.bf16.msra.mxu0 0
    %94 = vmatprep.subr.bf16.mxu0 0
    %95 = vmatpush1.bf16.msra.mxu0 0
    %96 = vmatprep.subr.bf16.mxu0 0
    %97 = vmatpush1.bf16.msra.mxu0 0
    %98 = vmatprep.subr.bf16.mxu0 0
    %99 = vmatpush1.bf16.msra.mxu0 0
    %100 = vmatprep.subr.bf16.mxu0 0
    %101 = vmatpush1.bf16.msra.mxu0 0
    %102 = vmatprep.subr.bf16.mxu0 0
    %103 = vmatpush1.bf16.msra.mxu0 0
    %104 = vmatprep.subr.bf16.mxu0 0
    %105 = vmatpush1.bf16.msra.mxu0 0
    %106 = vmatprep.subr.bf16.mxu0 0
    %107 = vmatpush1.bf16.msra.mxu0 0
    %108 = vmatprep.subr.bf16.mxu0 0
    %109 = vmatpush1.bf16.msra.mxu0 0
    %110 = vmatprep.mubr.bf16.mxu0 0
    %111 = vmatmul.mubr.bf16.gmra.mrb[0].mxu0 %v76
    %v112 = vpop.f32.mrb[0].mxu0
    %v113 = vadd.f32 %v60, %v112
    %v114 = vpop.f32.mrb[0].mxu0
    %v115 = vpop.f32.mrb[0].mxu0
    %v116 = vadd.f32 %v60, %v115
    %v117 = vpop.f32.mrb[0].mxu0
    %118 = vdwg.mxu0
    %v119 = vpack.c.bf16 %v116, %v113
    %v121 = vunpack.c.l.b16 %v119
    %v122 = vunpack.c.h.b16 %v119
    %v123 = vpack.c.b16 %v121, %v121
    %v124 = vpack.c.b16 %v122, %v122
    %vm127 = vcmask 257024
    %128 = vst.msk [vmem:[#allocation7] sm:$0xf] %vm127, %v123
    %129 = vst.msk [vmem:[#allocation7 + $0x4] sm:$0xf] %vm127, %v124
    %130 = vrot.lane.b32.xlu0 %v123, 96
    %v131 = vpop.permute.xlu0 %130
    %132 = vrot.lane.b32.xlu0 %v124, 96
    %v133 = vpop.permute.xlu0 %132
    %136 = vst.msk [vmem:[#allocation8] sm:$0xf] %vm127, %v131
    %137 = vst.msk [vmem:[#allocation8 + $0x4] sm:$0xf] %vm127, %v133
    %138 = vrot.lane.b32.xlu0 %v123, 64
    %v139 = vpop.permute.xlu0 %138
    %140 = vrot.lane.b32.xlu0 %v124, 64
    %v141 = vpop.permute.xlu0 %140
    %144 = vst.msk [vmem:[#allocation10] sm:$0xf] %vm127, %v139
    %145 = vst.msk [vmem:[#allocation10 + $0x4] sm:$0xf] %vm127, %v141
    // Predicated region
    $region22: #{tpu_custom_call.1} parent=1 // pred_check
      _
    $region23: #{tpu_custom_call.1} parent=1 // pred_check_branch
      %147 = sbr.rel (0) target = $region25
    $region24: #{tpu_custom_call.1} parent=1 // pred_region
      %s149 = ssub.s32 128, 128
      %150 = vsyncadd [#allocation4], %s149
      %s151 = sshll.u32 [#allocation7], 4
      %s152 = int_to_ptr.vmem [resolvable:$true] %s151
      %157 = dma.vmem_to_hbm [thread:$0]  %s152, 128, %s3, [#allocation4], 64, 64, 4
    $region25: #{tpu_custom_call.1} parent=1 // pred_fallthru
      _
    // Predicated region
    $region26: #{tpu_custom_call.1} parent=1 // pred_check
      _
    $region27: #{tpu_custom_call.1} parent=1 // pred_check_branch
      %159 = sbr.rel (0) target = $region29
    $region28: #{tpu_custom_call.1} parent=1 // pred_region
      %s161 = ssub.s32 128, 128
      %162 = vsyncadd [#allocation9], %s161
      %s163 = sshll.u32 [#allocation8], 4
      %s164 = int_to_ptr.vmem [resolvable:$true] %s163
      %169 = dma.vmem_to_hbm [thread:$0]  %s164, 128, %s4, [#allocation9], 64, 64, 4
    $region29: #{tpu_custom_call.1} parent=1 // pred_fallthru
      _
    // Predicated region
    $region30: #{tpu_custom_call.1} parent=1 // pred_check
      _
    $region31: #{tpu_custom_call.1} parent=1 // pred_check_branch
      %171 = sbr.rel (0) target = $region33
    $region32: #{tpu_custom_call.1} parent=1 // pred_region
      %s173 = ssub.s32 128, 128
      %174 = vsyncadd [#allocation9], %s173
      %s175 = sshll.u32 [#allocation10], 4
      %s176 = int_to_ptr.vmem [resolvable:$true] %s175
      %181 = dma.vmem_to_hbm [thread:$0]  %s176, 128, %s5, [#allocation9], 64, 64, 4
    $region33: #{tpu_custom_call.1} parent=1 // pred_fallthru
      _
    // Predicated region
    $region34: #{tpu_custom_call.1} parent=1 // pred_check
      _
    $region35: #{tpu_custom_call.1} parent=1 // pred_check_branch
      %183 = sbr.rel (0) target = $region37
    $region36: #{tpu_custom_call.1} parent=1 // pred_region
      %184 = dma.done [#allocation4], 128
    $region37: #{tpu_custom_call.1} parent=1 // pred_fallthru
      _
    // Predicated region
    $region38: #{tpu_custom_call.1} parent=1 // pred_check
      _
    $region39: #{tpu_custom_call.1} parent=1 // pred_check_branch
      %186 = sbr.rel (0) target = $region41
    $region40: #{tpu_custom_call.1} parent=1 // pred_region
      %187 = dma.done [#allocation9], 128
    $region41: #{tpu_custom_call.1} parent=1 // pred_fallthru
      _
    // Predicated region
    $region42: #{tpu_custom_call.1} parent=1 // pred_check
      _
    $region43: #{tpu_custom_call.1} parent=1 // pred_check_branch
      %189 = sbr.rel (0) target = $region45
    $region44: #{tpu_custom_call.1} parent=1 // pred_region
      %190 = dma.done [#allocation9], 128
    $region45: #{tpu_custom_call.1} parent=1 // pred_fallthru
      _
    %191 = vsyncpa [#allocation3], 1
    %192 = vsyncpa [#allocation6], 1
    %193 = vsyncpa [#allocation4], 1
    %194 = vsyncpa [#allocation9], 1

</llo_original>
